<compile_context>
chip_gen: v7x
topology: tpu7x:2x2x1
jax: 0.10.0
libtpu: 0.0.40
codegen_flags: <defaults>
</compile_context>

<pallas_src>
import functools

import jax
import jax.numpy as jnp
from jax.experimental import pallas as pl
from jax.experimental.pallas import tpu as pltpu


def _cdiv(a, b):
    return -(-a // b)


def _topic_classifier_kernel(x_ref, w_ref, b_ref, o_ref, acc_ref):
    # x_ref:  (bm, tk)  bf16/f32  streamed batch x vocab slab
    # w_ref:  (1, tk)   bf16/f32  folded-weight slab
    # b_ref:  (1, 1)    f32       folded bias, SMEM scalar
    # o_ref:  (1, bm)   f32       lane-dense output tile (batch on lanes)
    # acc_ref:(1, bm)   f32       VMEM accumulator across the vocab axis
    k = pl.program_id(1)

    @pl.when(k == 0)
    def _():
        acc_ref[...] = jnp.zeros_like(acc_ref)

    # (1, tk) x (bm, tk)^T -> (1, bm); contraction over the vocab axis,
    # batch lands on the lane dimension.  f32 accumulation.
    acc_ref[...] += jax.lax.dot_general(
        w_ref[...], x_ref[...],
        dimension_numbers=(((1,), (1,)), ((), ())),
        preferred_element_type=jnp.float32,
    )

    @pl.when(k == pl.num_programs(1) - 1)
    def _():
        z = acc_ref[...] + b_ref[0, 0]
        # Numerically stable sigmoid: exp argument is always <= 0.
        ez = jnp.exp(-jnp.abs(z))
        num = jnp.where(z >= 0, 1.0, ez)
        o_ref[...] = (num / (1.0 + ez)).astype(o_ref.dtype)


def _vmem_capacity_bytes():
    try:
        return int(pltpu.get_tpu_info().vmem_capacity_bytes)
    except Exception:
        return 64 * 1024 * 1024  # conservative (v7x per-TensorCore)


def _choose_tiles(B, V128, x_itemsize):
    """Pick (bm, tk): multiples of 128, VMEM-budget aware."""
    # --- batch tile ---------------------------------------------------------
    B128 = 128 * _cdiv(B, 128)
    bm = min(1024, B128)
    if B128 >= 256:
        # Keep >= 2 grid steps on the batch axis: megacore sharding (v7x) and
        # pipeline prologue/epilogue overlap need something to split.
        bm = min(bm, max(128, (B128 // 2) // 128 * 128))
    bm = max(bm, 128)

    # --- vocab tile ---------------------------------------------------------
    cap = _vmem_capacity_bytes()
    # Budget ~40% of VMEM for the double-buffered x slab; keep per-step DMAs
    # large (>= a few MiB) so the HBM stream stays near roofline.
    x_budget = max(4 << 20, int(cap * 0.4))
    tk_max = max(128, (x_budget // (2 * bm * x_itemsize)) // 128 * 128)
    tk = min(V128, tk_max)
    return bm, tk, cap


@functools.partial(jax.jit, static_argnames=("use_bf16",))
def topic_classifier_forward(x, params, *, use_bf16=True):
    """sigmoid(dense3(dense2(dense1(x)))) -- returns (B, 1) float32."""
    B, V = x.shape
    W1, b1 = params["W1"], params["b1"]          # (64, V),   (64,)
    W2, b2 = params["W2"], params["b2"]          # (128, 64), (128,)
    W3, b3 = params["W3"], params["b3"]          # (1, 128),  (1,)

    # Exact algebraic collapse of the three bias-only Linear layers.
    w_eff = (W3 @ W2 @ W1).astype(jnp.float32)                        # (1, V)
    b_eff = (W3 @ (W2 @ b1 + b2) + b3).reshape(1, 1).astype(jnp.float32)

    # bf16 streaming halves HBM traffic; dot still accumulates in f32.
    x_dtype = jnp.bfloat16 if use_bf16 else jnp.float32
    itemsize = jnp.dtype(x_dtype).itemsize

    V128 = 128 * _cdiv(V, 128)
    bm, tk, vmem_cap = _choose_tiles(B, V128, itemsize)

    # Pick tiles first, then pad to multiples of the tiles (zero padding is
    # exact for the dot; padded rows are sliced away at the end).
    B_pad = bm * _cdiv(B, bm)
    V_pad = tk * _cdiv(V128, tk)

    x_p = jnp.pad(x.astype(x_dtype), ((0, B_pad - B), (0, V_pad - V)))
    w_p = jnp.pad(w_eff.astype(x_dtype), ((0, 0), (0, V_pad - V)))

    grid = (B_pad // bm, V_pad // tk)

    # Explicit VMEM limit: x double-buffer plus generous headroom for the
    # weight slabs / accumulator / output blocks, clamped to the chip.
    vmem_limit = 2 * bm * tk * itemsize + (16 << 20)
    vmem_limit = int(max(32 << 20, min(vmem_cap, vmem_limit)))

    out = pl.pallas_call(
        _topic_classifier_kernel,
        out_shape=jax.ShapeDtypeStruct((1, B_pad), jnp.float32),
        grid=grid,
        in_specs=[
            pl.BlockSpec((bm, tk), lambda i, k: (i, k)),       # streamed x slabs
            pl.BlockSpec((1, tk), lambda i, k: (0, k)),        # folded-weight slabs
            pl.BlockSpec(memory_space=pltpu.MemorySpace.SMEM), # scalar bias
        ],
        out_specs=pl.BlockSpec((1, bm), lambda i, k: (0, i)),  # lane-dense output
        scratch_shapes=[pltpu.VMEM((1, bm), jnp.float32)],     # f32 accumulator
        compiler_params=pltpu.CompilerParams(
            dimension_semantics=("parallel", "arbitrary"),
            vmem_limit_bytes=vmem_limit,
        ),
    )(x_p, w_p, b_eff)

    # (1, B_pad) lane-dense row -> (B, 1) to match the PyTorch module output.
    return out[0, :B, None]


def init_params(key, vocab_size, h1=64, h2=128):
    """PyTorch nn.Linear-shaped parameters with the default uniform init."""
    ks = jax.random.split(key, 6)

    def uniform(k, shape, fan_in):
        bound = 1.0 / jnp.sqrt(jnp.float32(fan_in))
        return jax.random.uniform(k, shape, jnp.float32, -bound, bound)

    return {
        "W1": uniform(ks[0], (h1, vocab_size), vocab_size),
        "b1": uniform(ks[1], (h1,), vocab_size),
        "W2": uniform(ks[2], (h2, h1), h1),
        "b2": uniform(ks[3], (h2,), h1),
        "W3": uniform(ks[4], (1, h2), h2),
        "b3": uniform(ks[5], (1,), h2),
    }


if __name__ == "__main__":
    key = jax.random.PRNGKey(0)
    k_x, k_p = jax.random.split(key)

    batch = 8            # "numMessages"-style batch of bag-of-words vectors
    vocab_size = 32      # len(vocab)

    x = jax.random.uniform(k_x, (batch, vocab_size), jnp.float32)
    params = init_params(k_p, vocab_size)

    out = jax.block_until_ready(topic_classifier_forward(x, params))

    # Reference: plain-JAX f32 layer-by-layer forward (same math as PyTorch).
    h = x @ params["W1"].T + params["b1"]
    h = h @ params["W2"].T + params["b2"]
    h = h @ params["W3"].T + params["b3"]
    ref = jax.nn.sigmoid(h)

    assert out.shape == (batch, 1)
    err = float(jnp.max(jnp.abs(out - ref)))
    # bf16 input/weight streaming (f32 accumulation) -> small, bounded error.
    assert err < 5e-3, err

    print("KERNEL_OK")
</pallas_src>

<mosaic_0001>
module attributes {stable_mosaic.version = 11 : i64} {
  func.func @_topic_classifier_kernel(%arg0: i32, %arg1: i32, %arg2: memref<128x128xbf16, #tpu.memory_space<vmem>>, %arg3: memref<1x128xbf16, #tpu.memory_space<vmem>>, %arg4: memref<1x1xf32, #tpu.memory_space<smem>>, %arg5: memref<1x128xf32, #tpu.memory_space<vmem>>, %arg6: memref<1x128xf32, #tpu.memory_space<vmem>>) attributes {dimension_semantics = [#tpu.dimension_semantics<parallel>, #tpu.dimension_semantics<arbitrary>], iteration_bounds = array<i64: 1, 1>, scalar_prefetch = 0 : i64, scratch_operands = 1 : i64, tpu.core_type = #tpu.core_type<tc>, window_params = [{transform_indices = @transform_0, window_bounds = array<i64: 128, 128>}, {transform_indices = @transform_1, window_bounds = array<i64: 1, 128>}, {transform_indices = @transform_2, window_bounds = array<i64: 1, 1>}, {transform_indices = @transform_3, window_bounds = array<i64: 1, 128>}]} {
    %c0_i32 = arith.constant 0 : i32
    %0 = arith.cmpi eq, %arg1, %c0_i32 : i32
    %1 = arith.extui %0 : i1 to i32
    %c0_i32_0 = arith.constant 0 : i32
    %2 = arith.cmpi ne, %1, %c0_i32_0 : i32
    scf.if %2 {
      %cst_10 = arith.constant 0.000000e+00 : f32
      %12 = vector.broadcast %cst_10 : f32 to vector<1x128xf32>
      %c0_11 = arith.constant 0 : index
      %c0_12 = arith.constant 0 : index
      %13 = vector.load %arg6[%c0_11, %c0_12] : memref<1x128xf32, #tpu.memory_space<vmem>>, vector<1x128xf32>
      tpu.vector_store %arg6[%c0_11, %c0_12], %12 {strides = array<i32>} : memref<1x128xf32, #tpu.memory_space<vmem>>, vector<1x128xf32>,
    } else {
    }
    %c0 = arith.constant 0 : index
    %c0_1 = arith.constant 0 : index
    %3 = vector.load %arg6[%c0, %c0_1] : memref<1x128xf32, #tpu.memory_space<vmem>>, vector<1x128xf32>
    %c0_2 = arith.constant 0 : index
    %c0_3 = arith.constant 0 : index
    %4 = vector.load %arg3[%c0_2, %c0_3] : memref<1x128xbf16, #tpu.memory_space<vmem>>, vector<1x128xbf16>
    %c0_4 = arith.constant 0 : index
    %c0_5 = arith.constant 0 : index
    %5 = vector.load %arg2[%c0_4, %c0_5] : memref<128x128xbf16, #tpu.memory_space<vmem>>, vector<128x128xbf16>
    %cst = arith.constant dense<0.000000e+00> : vector<1x128xf32>
    %6 = tpu.matmul %4, %5, %cst {dimension_numbers = #tpu.dot_dimension_numbers<[1], [1], [0], [0], [0, 0, 1, 0], [], []>} : vector<1x128xbf16>, vector<128x128xbf16>, vector<1x128xf32> -> vector<1x128xf32>
    %7 = arith.addf %3, %6 : vector<1x128xf32>
    %c0_6 = arith.constant 0 : index
    %c0_7 = arith.constant 0 : index
    %8 = vector.load %arg6[%c0_6, %c0_7] : memref<1x128xf32, #tpu.memory_space<vmem>>, vector<1x128xf32>
    tpu.vector_store %arg6[%c0_6, %c0_7], %7 {strides = array<i32>} : memref<1x128xf32, #tpu.memory_space<vmem>>, vector<1x128xf32>,
    %c0_i32_8 = arith.constant 0 : i32
    %9 = arith.cmpi eq, %arg1, %c0_i32_8 : i32
    %10 = arith.extui %9 : i1 to i32
    %c0_i32_9 = arith.constant 0 : i32
    %11 = arith.cmpi ne, %10, %c0_i32_9 : i32
    scf.if %11 {
      %c0_10 = arith.constant 0 : index
      %c0_11 = arith.constant 0 : index
      %12 = vector.load %arg6[%c0_10, %c0_11] : memref<1x128xf32, #tpu.memory_space<vmem>>, vector<1x128xf32>
      %c0_12 = arith.constant 0 : index
      %c0_13 = arith.constant 0 : index
      %13 = memref.load %arg4[%c0_12, %c0_13] : memref<1x1xf32, #tpu.memory_space<smem>>
      %14 = vector.broadcast %13 : f32 to vector<1x128xf32>
      %15 = arith.addf %12, %14 : vector<1x128xf32>
      %16 = math.absf %15 : vector<1x128xf32>
      %cst_14 = arith.constant 0.000000e+00 : f32
      %17 = vector.broadcast %cst_14 : f32 to vector<1x128xf32>
      %18 = arith.subf %17, %16 : vector<1x128xf32>
      %19 = math.exp %18 : vector<1x128xf32>
      %cst_15 = arith.constant 0.000000e+00 : f32
      %20 = vector.broadcast %cst_15 : f32 to vector<1x128xf32>
      %21 = arith.cmpf oge, %15, %20 : vector<1x128xf32>
      %cst_16 = arith.constant 1.000000e+00 : f32
      %22 = vector.broadcast %cst_16 : f32 to vector<1x128xf32>
      %23 = arith.select %21, %22, %19 : vector<1x128xi1>, vector<1x128xf32>
      %cst_17 = arith.constant 1.000000e+00 : f32
      %24 = vector.broadcast %cst_17 : f32 to vector<1x128xf32>
      %25 = arith.addf %24, %19 : vector<1x128xf32>
      %26 = arith.divf %23, %25 : vector<1x128xf32>
      %c0_18 = arith.constant 0 : index
      %c0_19 = arith.constant 0 : index
      %27 = vector.load %arg5[%c0_18, %c0_19] : memref<1x128xf32, #tpu.memory_space<vmem>>, vector<1x128xf32>
      tpu.vector_store %arg5[%c0_18, %c0_19], %26 {strides = array<i32>} : memref<1x128xf32, #tpu.memory_space<vmem>>, vector<1x128xf32>,
    } else {
    }
    return
  }
  func.func @transform_0(%arg0: i32, %arg1: i32) -> (i32, i32) {
    %c0_i32 = arith.constant 0 : i32
    return %arg0, %arg1 : i32, i32
  }
  func.func @transform_1(%arg0: i32, %arg1: i32) -> (i32, i32) {
    %c0_i32 = arith.constant 0 : i32
    %c0_i32_0 = arith.constant 0 : i32
    return %c0_i32, %arg1 : i32, i32
  }
  func.func @transform_2(%arg0: i32, %arg1: i32) -> (i32, i32) {
    %c0_i32 = arith.constant 0 : i32
    %c0_i32_0 = arith.constant 0 : i32
    %c0_i32_1 = arith.constant 0 : i32
    return %c0_i32, %c0_i32_0 : i32, i32
  }
  func.func @transform_3(%arg0: i32, %arg1: i32) -> (i32, i32) {
    %c0_i32 = arith.constant 0 : i32
    %c0_i32_0 = arith.constant 0 : i32
    return %c0_i32, %arg0 : i32, i32
  }
}

</mosaic_0001>

<llo_original>
// kernel: topic_classifier_forward.1
$region0: #{topic_classifier_forward.1}
  #allocation0 [shape = 'u32[]', space=smem, size = 0x4, offset = 0x4, fixed_abs, tag = 'smem constant byte address 0x4 - core index']
  #allocation1 [shape = 'u32[144,128]{1,0:T(1,128)}', space=vmem, size = 0x12000, scoped, tag = 'internal scratch']
  #allocation2 [shape = 'f32[1,128]{1,0:T(1,128)}', space=vmem, size = 0x200, scoped, tag = 'scratch operand']
  #allocation3 [shape = 'f32[1,1]{1,0:T(1,128)S(6)}', space=smem, size = 0x200, scoped, tag = 'scoped memory for topic_classifier_forward.1']
  %s0 = inlined_call_operand.vmem [shape: bf16[128,128], index: 0, kind: input, shape index: {}]
  %s1 = inlined_call_operand.vmem [shape: bf16[1,128], index: 1, kind: input, shape index: {}]
  %s2 = inlined_call_operand.<no memory space> [shape: f32[1,1], index: 2, kind: input, shape index: {}]
  %s3 = inlined_call_operand.vmem [shape: f32[1,128], index: 3, kind: output, shape index: {}]
  %s4 = sld [smem:[#allocation0]]
  $region30: #{topic_classifier_forward.1} parent=0
    _
  %s6 = ssub.s32 1, %s4
  %s7 = scalar_select 0, %s6, %s4
  %8 = sst [smem:[#allocation3]] %s2
  // Predicated region
  $region2: #{topic_classifier_forward.1} parent=0 // pred_check
    _
  $region3: #{topic_classifier_forward.1} parent=0 // pred_check_branch
    %10 = sbr.rel (0) target = $region5
  $region4: #{topic_classifier_forward.1} parent=0 // pred_region
    _
  $region5: #{topic_classifier_forward.1} parent=0 // pred_fallthru
    _
  // Predicated region
  $region6: #{topic_classifier_forward.1} parent=0 // pred_check
    _
  $region7: #{topic_classifier_forward.1} parent=0 // pred_check_branch
    %12 = sbr.rel (0) target = $region9
  $region8: #{topic_classifier_forward.1} parent=0 // pred_region
    _
  $region9: #{topic_classifier_forward.1} parent=0 // pred_fallthru
    _
  // Predicated region
  $region10: #{topic_classifier_forward.1} parent=0 // pred_check
    _
  $region11: #{topic_classifier_forward.1} parent=0 // pred_check_branch
    %14 = sbr.rel (0) target = $region13
  $region12: #{topic_classifier_forward.1} parent=0 // pred_region
    _
  $region13: #{topic_classifier_forward.1} parent=0 // pred_fallthru
    _
  %p16 = scmp.eq.s32.totalorder 0, 0
  // Predicated region
  $region14: #{topic_classifier_forward.1} parent=0 // pred_check
    %p17 = pneg %p16
  $region15: #{topic_classifier_forward.1} parent=0 // pred_check_branch
    %19 = sbr.rel (%p17) target = $region17
  $region16: #{topic_classifier_forward.1} parent=0 // pred_region
    %20 = vst [vmem:[#allocation2] sm:$0x1] 0.0
  $region17: #{topic_classifier_forward.1} parent=0 // pred_fallthru
    _
  %v21 = vld [vmem:[#allocation2] sm:$0x1]
  %v22 = vld [vmem:[%s1] sm:$0x1]
  %v23 = vld [vmem:[%s0] sm:$0xf]
  %v24 = vld [vmem:[%s0 + $0x4] sm:$0xf]
  %v25 = vld [vmem:[%s0 + $0x8] sm:$0xf]
  %v26 = vld [vmem:[%s0 + $0xc] sm:$0xf]
  %v27 = vld [vmem:[%s0 + $0x10] sm:$0xf]
  %v28 = vld [vmem:[%s0 + $0x14] sm:$0xf]
  %v29 = vld [vmem:[%s0 + $0x18] sm:$0xf]
  %v30 = vld [vmem:[%s0 + $0x1c] sm:$0xf]
  %v31 = vld [vmem:[%s0 + $0x20] sm:$0xf]
  %v32 = vld [vmem:[%s0 + $0x24] sm:$0xf]
  %v33 = vld [vmem:[%s0 + $0x28] sm:$0xf]
  %v34 = vld [vmem:[%s0 + $0x2c] sm:$0xf]
  %v35 = vld [vmem:[%s0 + $0x30] sm:$0xf]
  %v36 = vld [vmem:[%s0 + $0x34] sm:$0xf]
  %v37 = vld [vmem:[%s0 + $0x38] sm:$0xf]
  %v38 = vld [vmem:[%s0 + $0x3c] sm:$0xf]
  %v55 = vunpack.c.l.b16 %v23
  %v56 = vunpack.c.l.b16 %v24
  %v57 = vunpack.c.l.b16 %v25
  %v58 = vunpack.c.l.b16 %v26
  %v59 = vunpack.c.l.b16 %v27
  %v60 = vunpack.c.l.b16 %v28
  %v61 = vunpack.c.l.b16 %v29
  %v62 = vunpack.c.l.b16 %v30
  %v63 = vunpack.c.l.b16 %v31
  %v64 = vunpack.c.l.b16 %v32
  %v65 = vunpack.c.l.b16 %v33
  %v66 = vunpack.c.l.b16 %v34
  %v67 = vunpack.c.l.b16 %v35
  %v68 = vunpack.c.l.b16 %v36
  %v69 = vunpack.c.l.b16 %v37
  %v70 = vunpack.c.l.b16 %v38
  %v71 = vpack.c.b16 %v56, %v55
  %v72 = vpack.c.b16 %v58, %v57
  %v73 = vpack.c.b16 %v60, %v59
  %v74 = vpack.c.b16 %v62, %v61
  %v75 = vpack.c.b16 %v64, %v63
  %v76 = vpack.c.b16 %v66, %v65
  %v77 = vpack.c.b16 %v68, %v67
  %v78 = vpack.c.b16 %v70, %v69
  %87 = vmatprep.subr.bf16.mxu0 0
  %88 = vmatpush1.bf16.xpose.msra.mxu0 %v71
  %89 = vmatprep.subr.bf16.mxu0 0
  %90 = vmatpush1.bf16.xpose.msra.mxu0 %v72
  %91 = vmatprep.subr.bf16.mxu0 0
  %92 = vmatpush1.bf16.xpose.msra.mxu0 %v73
  %93 = vmatprep.subr.bf16.mxu0 0
  %94 = vmatpush1.bf16.xpose.msra.mxu0 %v74
  %95 = vmatprep.subr.bf16.mxu0 0
  %96 = vmatpush1.bf16.xpose.msra.mxu0 %v75
  %97 = vmatprep.subr.bf16.mxu0 0
  %98 = vmatpush1.bf16.xpose.msra.mxu0 %v76
  %99 = vmatprep.subr.bf16.mxu0 0
  %100 = vmatpush1.bf16.xpose.msra.mxu0 %v77
  %101 = vmatprep.subr.bf16.mxu0 0
  %102 = vmatpush1.bf16.xpose.msra.mxu0 %v78
  %103 = vmatprep.subr.bf16.mxu0 0
  %104 = vmatpush1.bf16.xpose.msra.mxu0 0
  %105 = vmatprep.subr.bf16.mxu0 0
  %106 = vmatpush1.bf16.xpose.msra.mxu0 0
  %107 = vmatprep.subr.bf16.mxu0 0
  %108 = vmatpush1.bf16.xpose.msra.mxu0 0
  %109 = vmatprep.subr.bf16.mxu0 0
  %110 = vmatpush1.bf16.xpose.msra.mxu0 0
  %111 = vmatprep.subr.bf16.mxu0 0
  %112 = vmatpush1.bf16.xpose.msra.mxu0 0
  %113 = vmatprep.subr.bf16.mxu0 0
  %114 = vmatpush1.bf16.xpose.msra.mxu0 0
  %115 = vmatprep.subr.bf16.mxu0 0
  %116 = vmatpush1.bf16.xpose.msra.mxu0 0
  %117 = vmatprep.subr.bf16.mxu0 0
  %118 = vmatpush1.bf16.xpose.msra.mxu0 0
  %119 = vmatprep.mubr.bf16.mxu0 0
  %120 = vmatmul.mubr.bf16.gmra.mrb[0].mxu0 %v22
  %v121 = vpop.f32.mrb[0].mxu0
  %v122 = vadd.f32 0.0, %v121
  %v123 = vpop.f32.mrb[0].mxu0
  %v124 = vpop.f32.mrb[0].mxu0
  %v125 = vpop.f32.mrb[0].mxu0
  %126 = vdwg.mxu0
  %v127 = vadd.f32 %v21, %v122
  %128 = vst [vmem:[#allocation2] sm:$0x1] %v127
  // Predicated region
  $region18: #{topic_classifier_forward.1} parent=0 // pred_check
    %p129 = pneg %p16
  $region19: #{topic_classifier_forward.1} parent=0 // pred_check_branch
    %131 = sbr.rel (%p129) target = $region21
  $region20: #{topic_classifier_forward.1} parent=0 // pred_region
    %v132 = vld [vmem:[#allocation2] sm:$0x1]
    %s133 = sld [smem:[#allocation3]]
    %v134 = vstv %s133
    %v135 = vadd.f32 %v132, %v134
    %v136 = vand.u32 2147483647, %v135
    %v137 = vsub.f32 0.0, %v136
    %v138 = vmul.f32 %v137, 1.442695
    %v139 = vpow.pop %v138
    %vm140 = vcmp.ge.f32.partialorder %v135, 0.0
    %v141 = vsel %vm140, 1.0, %v139
    %v142 = vadd.f32 %v139, 1.0
    %v143 = vrcp.pop %v142
    %v144 = vmul.f32 %v141, %v143
    %145 = vst [vmem:[%s3] sm:$0x1] %v144
  $region21: #{topic_classifier_forward.1} parent=0 // pred_fallthru
    _
  // Predicated region
  $region22: #{topic_classifier_forward.1} parent=0 // pred_check
    _
  $region23: #{topic_classifier_forward.1} parent=0 // pred_check_branch
    %147 = sbr.rel (0) target = $region25
  $region24: #{topic_classifier_forward.1} parent=0 // pred_region
    _
  $region25: #{topic_classifier_forward.1} parent=0 // pred_fallthru
    _
  // Predicated region
  $region26: #{topic_classifier_forward.1} parent=0 // pred_check
    _
  $region27: #{topic_classifier_forward.1} parent=0 // pred_check_branch
    %149 = sbr.rel (0) target = $region29
  $region28: #{topic_classifier_forward.1} parent=0 // pred_region
    _
  $region29: #{topic_classifier_forward.1} parent=0 // pred_fallthru
    _

</llo_original>
